<compile_context>
chip_gen: v7x
topology: tpu7x:2x2x1
jax: 0.10.0
libtpu: 0.0.40
codegen_flags: <defaults>
</compile_context>

<pallas_src>
import functools

import jax
import jax.numpy as jnp
from jax.experimental import pallas as pl
from jax.experimental.pallas import tpu as pltpu


def layernorm_kernel(x_ref, w_ref, b_ref, o_ref, *, eps, bf16_epilogue):
    x_raw = x_ref[...]                                   # (tile_rows, H)
    xf = x_raw.astype(jnp.float32)

    u = jnp.mean(xf, axis=-1, keepdims=True)             # row mean, f32
    # Biased variance.  Recompute (x - u) here and again in the epilogue
    # instead of keeping a full (tile, H) centered f32 temporary live across
    # the reduce + rsqrt (drops ~1 f32-tile of VMEM/vreg pressure).
    s = jnp.mean(jnp.square(xf - u), axis=-1, keepdims=True)
    inv = jax.lax.rsqrt(s + eps)                         # (tile, 1), f32

    if bf16_epilogue:
        # v6e/v7x bf16 VPU: wide elementwise epilogue in the input dtype keeps
        # the kernel on the HBM roofline at 3.2 TB/s (stats stay f32 above).
        dt = x_raw.dtype
        o_ref[...] = (
            (x_raw - u.astype(dt)) * inv.astype(dt) * w_ref[...].astype(dt)
            + b_ref[...].astype(dt)
        ).astype(o_ref.dtype)
    else:
        w = w_ref[...].astype(jnp.float32)               # (1, H) broadcast
        b = b_ref[...].astype(jnp.float32)
        o_ref[...] = (((xf - u) * inv) * w + b).astype(o_ref.dtype)


def _tpu_config():
    """Returns (vmem_capacity_bytes, two_core_chip, bf16_vpu) with safe fallbacks."""
    vmem = 64 * 2**20          # conservative default = v7x per-TC VMEM
    kind = ""
    try:
        vmem = int(pltpu.get_tpu_info().vmem_capacity_bytes)
    except Exception:
        pass
    try:
        kind = jax.devices()[0].device_kind.lower()
    except Exception:
        pass
    small_vmem = vmem < 100 * 2**20
    two_cores = small_vmem or ("v7" in kind)             # v7x: 2 TCs/chip
    bf16_vpu = ("v6" in kind) or ("v7" in kind)          # v5e VPU has no bf16
    return vmem, two_cores, bf16_vpu


def _pick_tile_rows(rows, hidden, dtype, vmem_capacity, even_grid, requested=None):
    """Largest lane-friendly row tile fitting a generation-aware VMEM budget."""
    elem = jnp.dtype(dtype).itemsize
    mult = 16 if elem == 2 else 8                        # sublane multiple

    big_vmem = vmem_capacity >= 100 * 2**20              # 128 MiB parts
    budget = (90 if big_vmem else 36) * 2**20            # tile-buffer budget

    # Per-row live bytes: 2x double-buffered input + 2x double-buffered output
    # in native dtype, plus ~3 f32 tile temporaries.
    per_row = 4 * hidden * elem + 3 * hidden * 4
    max_by_vmem = max(mult, budget // per_row)

    tr = requested if requested is not None else 1024
    tr = min(tr, max_by_vmem)
    tr = max(mult, (tr // mult) * mult)

    rows_padded = ((rows + mult - 1) // mult) * mult
    tr = min(tr, rows_padded)

    if even_grid:
        # v7x: keep the 'parallel' grid split evenly across the 2 TensorCores.
        steps = (rows + tr - 1) // tr
        if steps > 1 and steps % 2 == 1:
            new_tr = (rows + steps) // (steps + 1)       # ceil(rows/(steps+1))
            new_tr = max(mult, ((new_tr + mult - 1) // mult) * mult)
            if new_tr <= tr and ((rows + new_tr - 1) // new_tr) % 2 == 0:
                tr = new_tr
    return tr


def layer_norm(x, weight, bias, eps=1e-12, tile_rows=None):
    """x: (..., hidden). Returns same shape/dtype, normalized over last dim."""
    orig_shape = x.shape
    hidden = orig_shape[-1]
    rows = 1
    for d in orig_shape[:-1]:
        rows *= d
    x2 = x.reshape(rows, hidden)
    w2 = weight.reshape(1, hidden)
    b2 = bias.reshape(1, hidden)

    vmem_capacity, two_cores, bf16_vpu = _tpu_config()
    big_vmem = vmem_capacity >= 100 * 2**20

    tr = _pick_tile_rows(rows, hidden, x.dtype, vmem_capacity,
                         even_grid=two_cores, requested=tile_rows)
    grid = (pl.cdiv(rows, tr),)   # ragged last block handled by Pallas masking

    elem = jnp.dtype(x.dtype).itemsize
    # 2x dbuf input + 2x dbuf output (native dtype) + ~3 f32 tile temporaries
    # + broadcast weight/bias rows.
    vmem_needed = (4 * tr * hidden * elem) + (3 * tr * hidden * 4) + (4 * hidden * 4)
    cap = (110 if big_vmem else 56) * 2**20
    vmem_limit = int(min(cap, max(16 * 2**20, int(vmem_needed * 1.25))))

    bf16_epilogue = bool(bf16_vpu) and x.dtype == jnp.bfloat16

    # TODO(synk): if H < 128 shapes matter in production, pack k rows into the
    # lane axis so the output block is lane-dense (avoids masked vst.msk).

    kernel = functools.partial(layernorm_kernel, eps=eps,
                               bf16_epilogue=bf16_epilogue)

    out = pl.pallas_call(
        kernel,
        out_shape=jax.ShapeDtypeStruct((rows, hidden), x.dtype),
        grid_spec=pltpu.PrefetchScalarGridSpec(
            num_scalar_prefetch=0,
            grid=grid,
            in_specs=[
                pl.BlockSpec((tr, hidden), lambda i: (i, 0)),
                pl.BlockSpec((1, hidden), lambda i: (0, 0)),
                pl.BlockSpec((1, hidden), lambda i: (0, 0)),
            ],
            out_specs=pl.BlockSpec((tr, hidden), lambda i: (i, 0)),
        ),
        compiler_params=pltpu.CompilerParams(
            dimension_semantics=("parallel",),
            vmem_limit_bytes=vmem_limit,
        ),
    )(x2, w2, b2)

    return out.reshape(orig_shape)


if __name__ == "__main__":
    key = jax.random.PRNGKey(0)
    batch, seq, hidden = 2, 8, 32

    x = jax.random.normal(key, (batch, seq, hidden), dtype=jnp.float32)

    # Deterministic params matching nn.Parameter(torch.ones/zeros(hidden))
    weight = jnp.ones((hidden,), dtype=jnp.float32)
    bias = jnp.zeros((hidden,), dtype=jnp.float32)

    y = layer_norm(x, weight, bias, eps=1e-12)
    y = jax.block_until_ready(y)

    # reference check in plain JAX
    u = jnp.mean(x, axis=-1, keepdims=True)
    s = jnp.mean((x - u) ** 2, axis=-1, keepdims=True)
    ref = weight * ((x - u) / jnp.sqrt(s + 1e-12)) + bias
    assert y.shape == x.shape and y.dtype == x.dtype
    assert jnp.allclose(y, ref, atol=1e-5, rtol=1e-5)

    print("KERNEL_OK")
</pallas_src>

<mosaic_0001>
module attributes {stable_mosaic.version = 11 : i64} {
  func.func @layernorm_kernel(%arg0: i32, %arg1: memref<16x32xf32, #tpu.memory_space<vmem>>, %arg2: memref<1x32xf32, #tpu.memory_space<vmem>>, %arg3: memref<1x32xf32, #tpu.memory_space<vmem>>, %arg4: memref<16x32xf32, #tpu.memory_space<vmem>>) attributes {dimension_semantics = [#tpu.dimension_semantics<parallel>], iteration_bounds = array<i64: 1>, scalar_prefetch = 0 : i64, scratch_operands = 0 : i64, tpu.core_type = #tpu.core_type<tc>, window_params = [{transform_indices = @transform_0, window_bounds = array<i64: 16, 32>}, {pipeline_mode = #tpu.pipeline_mode<synchronous>, transform_indices = @transform_1, window_bounds = array<i64: 1, 32>}, {pipeline_mode = #tpu.pipeline_mode<synchronous>, transform_indices = @transform_2, window_bounds = array<i64: 1, 32>}, {transform_indices = @transform_3, window_bounds = array<i64: 16, 32>}]} {
    %c0 = arith.constant 0 : index
    %c0_0 = arith.constant 0 : index
    %0 = vector.load %arg1[%c0, %c0_0] : memref<16x32xf32, #tpu.memory_space<vmem>>, vector<16x32xf32>
    %cst = arith.constant dense<0.000000e+00> : vector<16xf32>
    %1 = vector.multi_reduction <add>, %0, %cst [1] : vector<16x32xf32> to vector<16xf32>
    %2 = vector.shape_cast %1 : vector<16xf32> to vector<16x1xf32>
    %cst_1 = arith.constant 3.200000e+01 : f32
    %3 = vector.broadcast %cst_1 : f32 to vector<16x1xf32>
    %4 = arith.divf %2, %3 : vector<16x1xf32>
    %5 = vector.broadcast %4 : vector<16x1xf32> to vector<16x32xf32>
    %6 = arith.subf %0, %5 : vector<16x32xf32>
    %7 = arith.mulf %6, %6 : vector<16x32xf32>
    %cst_2 = arith.constant dense<0.000000e+00> : vector<16xf32>
    %8 = vector.multi_reduction <add>, %7, %cst_2 [1] : vector<16x32xf32> to vector<16xf32>
    %9 = vector.shape_cast %8 : vector<16xf32> to vector<16x1xf32>
    %cst_3 = arith.constant 3.200000e+01 : f32
    %10 = vector.broadcast %cst_3 : f32 to vector<16x1xf32>
    %11 = arith.divf %9, %10 : vector<16x1xf32>
    %cst_4 = arith.constant 9.99999996E-13 : f32
    %12 = vector.broadcast %cst_4 : f32 to vector<16x1xf32>
    %13 = arith.addf %11, %12 : vector<16x1xf32>
    %14 = math.rsqrt %13 : vector<16x1xf32>
    %c0_5 = arith.constant 0 : index
    %c0_6 = arith.constant 0 : index
    %15 = vector.load %arg2[%c0_5, %c0_6] : memref<1x32xf32, #tpu.memory_space<vmem>>, vector<1x32xf32>
    %c0_7 = arith.constant 0 : index
    %c0_8 = arith.constant 0 : index
    %16 = vector.load %arg3[%c0_7, %c0_8] : memref<1x32xf32, #tpu.memory_space<vmem>>, vector<1x32xf32>
    %17 = vector.broadcast %4 : vector<16x1xf32> to vector<16x32xf32>
    %18 = arith.subf %0, %17 : vector<16x32xf32>
    %19 = vector.broadcast %14 : vector<16x1xf32> to vector<16x32xf32>
    %20 = arith.mulf %18, %19 : vector<16x32xf32>
    %21 = vector.broadcast %15 : vector<1x32xf32> to vector<16x32xf32>
    %22 = arith.mulf %20, %21 : vector<16x32xf32>
    %23 = vector.broadcast %16 : vector<1x32xf32> to vector<16x32xf32>
    %24 = arith.addf %22, %23 : vector<16x32xf32>
    %c0_9 = arith.constant 0 : index
    %c0_10 = arith.constant 0 : index
    %25 = vector.load %arg4[%c0_9, %c0_10] : memref<16x32xf32, #tpu.memory_space<vmem>>, vector<16x32xf32>
    tpu.vector_store %arg4[%c0_9, %c0_10], %24 {strides = array<i32>} : memref<16x32xf32, #tpu.memory_space<vmem>>, vector<16x32xf32>,
    return
  }
  func.func @transform_0(%arg0: i32) -> (i32, i32) {
    %c0_i32 = arith.constant 0 : i32
    %c0_i32_0 = arith.constant 0 : i32
    return %arg0, %c0_i32 : i32, i32
  }
  func.func @transform_1(%arg0: i32) -> (i32, i32) {
    %c0_i32 = arith.constant 0 : i32
    %c0_i32_0 = arith.constant 0 : i32
    %c0_i32_1 = arith.constant 0 : i32
    return %c0_i32, %c0_i32_0 : i32, i32
  }
  func.func @transform_2(%arg0: i32) -> (i32, i32) {
    %c0_i32 = arith.constant 0 : i32
    %c0_i32_0 = arith.constant 0 : i32
    %c0_i32_1 = arith.constant 0 : i32
    return %c0_i32, %c0_i32_0 : i32, i32
  }
  func.func @transform_3(%arg0: i32) -> (i32, i32) {
    %c0_i32 = arith.constant 0 : i32
    %c0_i32_0 = arith.constant 0 : i32
    return %arg0, %c0_i32 : i32, i32
  }
}

</mosaic_0001>

<llo_original>
// kernel: tpu_custom_call.1
$region0: #{tpu_custom_call.1}
  #allocation0 [shape = 'u32[]', space=smem, size = 0x4, offset = 0x4, fixed_abs, tag = 'smem constant byte address 0x4 - core index']
  #allocation1 [shape = 'u32[144,128]{1,0:T(1,128)}', space=vmem, size = 0x12000, scoped, tag = 'internal scratch']
  %s0 = inlined_call_operand.hbm [shape: f32[16,32], index: 0, kind: input, shape index: {}]
  %s1 = inlined_call_operand.vmem [shape: f32[1,32], index: 1, kind: input, shape index: {}]
  %s2 = inlined_call_operand.vmem [shape: f32[1,32], index: 2, kind: input, shape index: {}]
  %s3 = inlined_call_operand.hbm [shape: f32[16,32], index: 3, kind: output, shape index: {}]
  %s4 = sld [smem:[#allocation0]]
  $region26: #{tpu_custom_call.1} parent=0
    _
  %s6 = ssub.s32 1, %s4
  %s7 = scalar_select 0, %s6, %s4
  $region1: #{tpu_custom_call.1} parent=0
    #allocation2 [shape = 'u8[8192]{0}', space=vmem, size = 0x2000, scoped, tag = 'input window, operand 0, single buffered']
    #allocation3 [shape = 's32[1]{0}', space=sflag, size = 0x4, scoped, tag = 'scoped memory for tpu_custom_call.1']
    #allocation4 [shape = 's32[1]{0}', space=sflag, size = 0x4, scoped, tag = 'scoped memory for tpu_custom_call.1']
    #allocation5 [shape = 'u8[8192]{0}', space=vmem, size = 0x2000, scoped, tag = 'output window, operand 0, single buffered']
    %8 = vsyncpa [#allocation3], 0
    %9 = vsyncpa [#allocation4], 0
    // Predicated region
    $region2: #{tpu_custom_call.1} parent=1 // pred_check
      _
    $region3: #{tpu_custom_call.1} parent=1 // pred_check_branch
      %11 = sbr.rel (0) target = $region5
    $region4: #{tpu_custom_call.1} parent=1 // pred_region
      %s13 = ssub.s32 256, 256
      %14 = vsyncadd [#allocation3], %s13
      %s15 = sshll.u32 [#allocation2], 4
      %s16 = int_to_ptr.vmem [resolvable:$true] %s15
      %21 = dma.hbm_to_vmem [thread:$0]  %s0, 256, %s16, [#allocation3], 128, 128, 8
    $region5: #{tpu_custom_call.1} parent=1 // pred_fallthru
      _
    // Predicated region
    $region6: #{tpu_custom_call.1} parent=1 // pred_check
      _
    $region7: #{tpu_custom_call.1} parent=1 // pred_check_branch
      %23 = sbr.rel (0) target = $region9
    $region8: #{tpu_custom_call.1} parent=1 // pred_region
      _
    $region9: #{tpu_custom_call.1} parent=1 // pred_fallthru
      _
    // Predicated region
    $region10: #{tpu_custom_call.1} parent=1 // pred_check
      _
    $region11: #{tpu_custom_call.1} parent=1 // pred_check_branch
      %25 = sbr.rel (0) target = $region13
    $region12: #{tpu_custom_call.1} parent=1 // pred_region
      _
    $region13: #{tpu_custom_call.1} parent=1 // pred_fallthru
      _
    // Predicated region
    $region14: #{tpu_custom_call.1} parent=1 // pred_check
      _
    $region15: #{tpu_custom_call.1} parent=1 // pred_check_branch
      %27 = sbr.rel (0) target = $region17
    $region16: #{tpu_custom_call.1} parent=1 // pred_region
      %28 = dma.done [#allocation3], 256
    $region17: #{tpu_custom_call.1} parent=1 // pred_fallthru
      _
    %v29 = vld [vmem:[#allocation2] sm:$0xff]
    %v30 = vld [vmem:[#allocation2 + $0x8] sm:$0xff]
    %vm31 = vcmask 261120
    %v32 = vsel %vm31, %v29, 0.0
    %33 = vadd.xlane.f32.xlu0 %v32
    %v34 = vpop.xlane.xlu0 %33
    %v35 = vsel %vm31, %v30, 0.0
    %36 = vadd.xlane.f32.xlu0 %v35
    %v37 = vpop.xlane.xlu0 %36
    %v38 = vrcp.pop 32.0
    %v39 = vmul.f32 %v34, %v38
    %v40 = vmul.f32 %v37, %v38
    %v41 = vsub.f32 %v29, %v39
    %v42 = vsub.f32 %v30, %v40
    %v43 = vmul.f32 %v41, %v41
    %v44 = vmul.f32 %v42, %v42
    %v45 = vsel %vm31, %v43, 0.0
    %46 = vadd.xlane.f32.xlu0 %v45
    %v47 = vpop.xlane.xlu0 %46
    %v48 = vsel %vm31, %v44, 0.0
    %49 = vadd.xlane.f32.xlu0 %v48
    %v50 = vpop.xlane.xlu0 %49
    %v51 = vmul.f32 %v47, %v38
    %v52 = vmul.f32 %v50, %v38
    %v53 = vadd.f32 %v51, 1e-12
    %v54 = vadd.f32 %v52, 1e-12
    %v55 = vrsqrt.pop %v53
    %v56 = vrsqrt.pop %v54
    %v57 = vld [vmem:[%s1] sm:$0x1]
    %v58 = vld [vmem:[%s2] sm:$0x1]
    %v59 = vmul.f32 %v41, %v55
    %v60 = vmul.f32 %v42, %v56
    %v62 = vlaneseq
    %v63 = vshrl.u32 %v62, 7
    %v64 = vsub.s32 0, %v63
    %v65 = vrot.slane %v57, %v64
    %v67 = vmul.f32 %v59, %v65
    %v68 = vmul.f32 %v60, %v65
    %v70 = vlaneseq
    %v71 = vshrl.u32 %v70, 7
    %v72 = vsub.s32 0, %v71
    %v73 = vrot.slane %v58, %v72
    %v75 = vadd.f32 %v67, %v73
    %v76 = vadd.f32 %v68, %v73
    %77 = vst.msk [vmem:[#allocation5] sm:$0xff] %vm31, %v75
    %78 = vst.msk [vmem:[#allocation5 + $0x8] sm:$0xff] %vm31, %v76
    // Predicated region
    $region18: #{tpu_custom_call.1} parent=1 // pred_check
      _
    $region19: #{tpu_custom_call.1} parent=1 // pred_check_branch
      %80 = sbr.rel (0) target = $region21
    $region20: #{tpu_custom_call.1} parent=1 // pred_region
      %s82 = ssub.s32 256, 256
      %83 = vsyncadd [#allocation4], %s82
      %s84 = sshll.u32 [#allocation5], 4
      %s85 = int_to_ptr.vmem [resolvable:$true] %s84
      %90 = dma.vmem_to_hbm [thread:$0]  %s85, 256, %s3, [#allocation4], 128, 128, 8
    $region21: #{tpu_custom_call.1} parent=1 // pred_fallthru
      _
    // Predicated region
    $region22: #{tpu_custom_call.1} parent=1 // pred_check
      _
    $region23: #{tpu_custom_call.1} parent=1 // pred_check_branch
      %92 = sbr.rel (0) target = $region25
    $region24: #{tpu_custom_call.1} parent=1 // pred_region
      %93 = dma.done [#allocation4], 256
    $region25: #{tpu_custom_call.1} parent=1 // pred_fallthru
      _
    %94 = vsyncpa [#allocation3], 1
    %95 = vsyncpa [#allocation4], 1

</llo_original>
